<compile_context>
chip_gen: v6e
topology: v6e:2x2x1
jax: 0.10.0
libtpu: 0.0.40
codegen_flags: <defaults>
</compile_context>

<pallas_src>
import functools

import jax
import jax.numpy as jnp
from jax import lax
from jax.experimental import pallas as pl
from jax.experimental.pallas import tpu as pltpu

ALPHA = 0.2            # LeakyReLU negative slope (GAT default alpha=0.2)
MASK_VALUE = -9e15     # matches the PyTorch -9000000000000000.0 mask
LANE = 128


def _round_up(v, m):
    return (v + m - 1) // m * m


def _elu(v):
    return jnp.where(v > 0, v, jnp.exp(v) - 1.0)


def _elementwise_dtype():
    """bf16 (TM,TK) softmax math on v6e/v7x (bf16-native VPU/EUP); f32 on v5e
    and unknown parts (no bf16 VPU path there -> converts would regress)."""
    try:
        kind = jax.devices()[0].device_kind.lower()
    except Exception:
        return jnp.float32
    if ("v6" in kind) or ("v7" in kind) or ("7x" in kind):
        return jnp.bfloat16
    return jnp.float32


def _block_spec(shape, index_map, buffers=None):
    """BlockSpec, optionally single-buffered for resident (never-changing)
    operands so default double-buffering does not waste VMEM on them."""
    if buffers is not None:
        try:
            return pl.BlockSpec(shape, index_map, pipeline_mode=pl.Buffered(buffers))
        except Exception:
            pass
    return pl.BlockSpec(shape, index_map)


def _vmem_limit_bytes(tm, tk, nfeat_p, nhid_p, nclass_p, ew_bytes):
    """Explicit scoped-VMEM request from the working set (2x headroom),
    clamped to a range safe on v7x (64 MiB physical) and v5e/v6e (128 MiB)."""
    stream2 = 2 * (tm * tk                 # adj int8 block
                   + tk * 4                # f2 row block (f32)
                   + tk * nhid_p * 2       # h key block (bf16)
                   + tm * nhid_p * 2       # h row block (bf16)
                   + tm * nclass_p * 4)    # output block (f32)
    resident = ((nhid_p * nhid_p + nhid_p * nclass_p) * 2
                + (3 * nhid_p + nclass_p) * 4)
    scratch = tm * nhid_p * 4 + 3 * tm * 4
    inter2 = 6 * tm * tk * ew_bytes        # live (TM,TK) softmax intermediates
    pass2 = stream2 + resident + scratch + inter2
    pass1 = (2 * (tm * nfeat_p * 2 + tm * nhid_p * 2 + tm * 4)
             + nfeat_p * nhid_p * 2 + nhid_p * 4 + 4 * tm * nhid_p * 4)
    need = max(pass1, pass2)
    return int(min(max(2 * need + (4 << 20), 16 << 20), 56 << 20))


# --------------------------------------------------------------------------
# Pass 1: h = x @ W  and the key-side attention-logit half f2_j = h_j . a2.
# --------------------------------------------------------------------------
def _precompute_kernel(x_ref, w_ref, a2_ref, h_ref, f2_ref):
    # bf16 operands on the MXU, f32 accumulation.
    h = jnp.dot(x_ref[...], w_ref[...], preferred_element_type=jnp.float32)
    # f2 via VPU multiply + lane reduction (the (N,nhid)x(nhid,1) matvec would
    # leave >99% of the MXU idle).
    f2_ref[...] = jnp.sum(h * a2_ref[...], axis=-1, keepdims=True)
    h_ref[...] = h.astype(h_ref.dtype)


# --------------------------------------------------------------------------
# Pass 2: column-tiled online-softmax attention + att@h + out_proj + mlp +
# log_softmax; grid = (row tiles "parallel", key tiles "arbitrary").
# --------------------------------------------------------------------------
def _attention_kernel(nclass, ew_dtype,
                      adj_ref, f2_ref, hk_ref, hr_ref, a1_ref,
                      wout_ref, bout_ref, wmlp_ref, bmlp_ref,
                      out_ref,
                      f1_sc, m_sc, l_sc, acc_sc):
    j = pl.program_id(1)
    mask_val = jnp.asarray(MASK_VALUE, ew_dtype)

    @pl.when(j == 0)
    def _():
        # f1_i = h_i . a1, recomputed from the resident h row block (one
        # (TM,128) multiply + lane reduce; rides in the MXU/VPU slack and
        # removes the lane-width-1 f1 output of pass 1).
        f1_sc[...] = jnp.sum(hr_ref[...].astype(jnp.float32) * a1_ref[...],
                             axis=-1, keepdims=True)
        m_sc[...] = jnp.full_like(m_sc, MASK_VALUE)
        l_sc[...] = jnp.zeros_like(l_sc)
        acc_sc[...] = jnp.zeros_like(acc_sc)

    # e_ij = LeakyReLU(f1_i + f2_j): broadcast add + max in ew_dtype
    # (bf16 on v6e/v7x halves the load on the binding VALU/EUP slots).
    e = f1_sc[...].astype(ew_dtype) + f2_ref[...].astype(ew_dtype)
    e = jnp.maximum(e, ALPHA * e)                        # LeakyReLU, no select
    logits = jnp.where(adj_ref[...] != 0, e, mask_val)   # int8 compared directly

    # Online softmax: running max / sum / unnormalized att@h accumulator.
    b_max = jnp.max(logits, axis=1, keepdims=True).astype(jnp.float32)
    m_new = jnp.maximum(m_sc[...], b_max)
    p = jnp.exp(logits - m_new.astype(ew_dtype))         # (TM, TK)
    # Row-sum, rescale factors and accumulator stay in f32 for accuracy.
    l_blk = jnp.sum(p.astype(jnp.float32), axis=1, keepdims=True)
    corr = jnp.exp(m_sc[...] - m_new)                    # (TM, 1)
    l_sc[...] = corr * l_sc[...] + l_blk
    acc_sc[...] = corr * acc_sc[...] + jnp.dot(
        p.astype(jnp.bfloat16), hk_ref[...], preferred_element_type=jnp.float32)
    m_sc[...] = m_new

    @pl.when(j == pl.num_programs(1) - 1)
    def _():
        # Fold the softmax normalization into the (TM, nhid) matmul output
        # instead of scaling the (TM, TK) probabilities (removes a full-width
        # VPU multiply per element on the binding slot).
        inv_l = pl.reciprocal(l_sc[...], approx=True)
        h_out = _elu(acc_sc[...] * inv_l)

        # out_proj Linear + ELU
        y = _elu(jnp.dot(h_out.astype(jnp.bfloat16), wout_ref[...],
                         preferred_element_type=jnp.float32) + bout_ref[...])

        # mlp Linear (class dim lane-padded to 128 for dense stores)
        z = jnp.dot(y.astype(jnp.bfloat16), wmlp_ref[...],
                    preferred_element_type=jnp.float32) + bmlp_ref[...]

        # log_softmax over the real classes only (padded lanes pushed to -inf-ish)
        col = lax.broadcasted_iota(jnp.int32, z.shape, 1)
        z = jnp.where(col < nclass, z, -1e30)
        zm = jnp.max(z, axis=1, keepdims=True)
        zs = z - zm
        lse = jnp.log(jnp.sum(jnp.exp(zs), axis=1, keepdims=True))
        out_ref[...] = zs - lse


# --------------------------------------------------------------------------
# Wrapper: padding / layout glue + the two pallas_calls.
# --------------------------------------------------------------------------
def gat_forward(x, adj, params, *, tm=256, tk=1024, ew_dtype=None,
                resident_buffers=1):
    """x: (N, nfeat) f32, adj: (N, N) with >0 meaning an edge.
    Returns (N, nclass) f32 log-probabilities.
    tm/tk are sweepable (v6e can raise tm to 512 within its 128 MiB VMEM)."""
    N, nfeat = x.shape
    nhid = params["w"].shape[1]
    nclass = params["wmlp"].shape[1]
    if ew_dtype is None:
        ew_dtype = _elementwise_dtype()

    # Row / key tiles: multiples of 128 (lane-dense adj / f2 streams, no masked
    # lane stores); n_pad is a multiple of both tm and 128.
    n128 = _round_up(N, LANE)
    tm = max(LANE, min(_round_up(int(tm), LANE), n128))
    n_pad = _round_up(N, tm)
    tk = max(LANE, min(_round_up(int(tk), LANE), n_pad))
    while n_pad % tk:
        tk -= LANE
    nfeat_p = _round_up(nfeat, LANE)
    nhid_p = _round_up(nhid, LANE)
    nclass_p = _round_up(nclass, LANE)

    # Zero padding keeps padded channels inert (ELU(0)=0); bf16 MXU operands,
    # int8 adjacency stream (4x less HBM traffic than f32).
    # TODO(synk): bit-pack adj (1 bit/edge) if the adj DMA is ever exposed on
    # v5e; on v6e/v7x it is hidden behind the VPU-bound softmax compute.
    xp = jnp.zeros((n_pad, nfeat_p), jnp.bfloat16).at[:N, :nfeat].set(
        x.astype(jnp.bfloat16))
    adj_i8 = jnp.zeros((n_pad, n_pad), jnp.int8).at[:N, :N].set(
        (adj > 0).astype(jnp.int8))
    w = jnp.zeros((nfeat_p, nhid_p), jnp.bfloat16).at[:nfeat, :nhid].set(
        params["w"].astype(jnp.bfloat16))
    a1 = jnp.zeros((1, nhid_p), jnp.float32).at[0, :nhid].set(params["a1"][:, 0])
    a2 = jnp.zeros((1, nhid_p), jnp.float32).at[0, :nhid].set(params["a2"][:, 0])
    wout = jnp.zeros((nhid_p, nhid_p), jnp.bfloat16).at[:nhid, :nhid].set(
        params["wout"].astype(jnp.bfloat16))
    bout = jnp.zeros((1, nhid_p), jnp.float32).at[0, :nhid].set(params["bout"][0])
    wmlp = jnp.zeros((nhid_p, nclass_p), jnp.bfloat16).at[:nhid, :nclass].set(
        params["wmlp"].astype(jnp.bfloat16))
    bmlp = jnp.zeros((1, nclass_p), jnp.float32).at[0, :nclass].set(
        params["bmlp"][0])

    vmem_limit = _vmem_limit_bytes(tm, tk, nfeat_p, nhid_p, nclass_p,
                                   jnp.dtype(ew_dtype).itemsize)

    def _run(res_buf):
        # --- pass 1: h = x @ W and f2_j = h_j . a2 (row-tiled) ---
        h, f2 = pl.pallas_call(
            _precompute_kernel,
            out_shape=(jax.ShapeDtypeStruct((n_pad, nhid_p), jnp.bfloat16),
                       jax.ShapeDtypeStruct((n_pad, 1), jnp.float32)),
            grid=(n_pad // tm,),
            in_specs=[
                pl.BlockSpec((tm, nfeat_p), lambda i: (i, 0)),           # x tile
                _block_spec((nfeat_p, nhid_p), lambda i: (0, 0), res_buf),  # W
                _block_spec((1, nhid_p), lambda i: (0, 0), res_buf),        # a2
            ],
            out_specs=(
                pl.BlockSpec((tm, nhid_p), lambda i: (i, 0)),
                pl.BlockSpec((tm, 1), lambda i: (i, 0)),
            ),
            compiler_params=pltpu.CompilerParams(
                dimension_semantics=("parallel",),
                vmem_limit_bytes=vmem_limit),
        )(xp, w, a2)

        # Lane-dense f2 row for pass 2 (tiny XLA reshape outside the kernel).
        f2_row = f2.reshape(1, n_pad)

        # --- pass 2: online-softmax attention + heads ---
        out = pl.pallas_call(
            functools.partial(_attention_kernel, nclass, ew_dtype),
            out_shape=jax.ShapeDtypeStruct((n_pad, nclass_p), jnp.float32),
            grid=(n_pad // tm, n_pad // tk),
            in_specs=[
                pl.BlockSpec((tm, tk), lambda i, j: (i, j)),             # adj
                pl.BlockSpec((1, tk), lambda i, j: (0, j)),              # f2
                pl.BlockSpec((tk, nhid_p), lambda i, j: (j, 0)),         # h keys
                pl.BlockSpec((tm, nhid_p), lambda i, j: (i, 0)),         # h rows
                _block_spec((1, nhid_p), lambda i, j: (0, 0), res_buf),      # a1
                _block_spec((nhid_p, nhid_p), lambda i, j: (0, 0), res_buf),   # wout
                _block_spec((1, nhid_p), lambda i, j: (0, 0), res_buf),        # bout
                _block_spec((nhid_p, nclass_p), lambda i, j: (0, 0), res_buf), # wmlp
                _block_spec((1, nclass_p), lambda i, j: (0, 0), res_buf),      # bmlp
            ],
            out_specs=pl.BlockSpec((tm, nclass_p), lambda i, j: (i, 0)),
            scratch_shapes=[pltpu.VMEM((tm, 1), jnp.float32),        # f1
                            pltpu.VMEM((tm, 1), jnp.float32),        # running max
                            pltpu.VMEM((tm, 1), jnp.float32),        # running sum
                            pltpu.VMEM((tm, nhid_p), jnp.float32)],  # acc
            compiler_params=pltpu.CompilerParams(
                dimension_semantics=("parallel", "arbitrary"),
                vmem_limit_bytes=vmem_limit),
        )(adj_i8, f2_row, h, h, a1, wout, bout, wmlp, bmlp)

        return out[:N, :nclass]

    if resident_buffers is None:
        return _run(None)
    try:
        return _run(resident_buffers)
    except Exception:
        # Fall back to default double-buffering if single-buffered resident
        # operands are not supported by this jax/Mosaic build.
        return _run(None)


def init_params(key, nfeat, nhid, nclass):
    """Deterministic synthetic init matching the module's parameter shapes."""
    k = jax.random.split(key, 6)
    w = jax.random.uniform(k[0], (nfeat, nhid), jnp.float32, -0.3, 0.3)
    a = jax.random.uniform(k[1], (2 * nhid, 1), jnp.float32, -0.3, 0.3)
    wout = 0.05 * jax.random.normal(k[2], (nhid, nhid), jnp.float32)    # W_out^T
    bout = jax.random.uniform(k[3], (1, nhid), jnp.float32, -0.1, 0.1)
    wmlp = 0.05 * jax.random.normal(k[4], (nhid, nclass), jnp.float32)  # W_mlp^T
    bmlp = jax.random.uniform(k[5], (1, nclass), jnp.float32, -0.1, 0.1)
    return dict(w=w, a1=a[:nhid], a2=a[nhid:], wout=wout, bout=bout,
                wmlp=wmlp, bmlp=bmlp)


def reference_forward(x, adj, p):
    """Pure-JAX f32 reference of the module forward (eval mode)."""
    h = x @ p["w"]
    e = h @ p["a1"] + (h @ p["a2"]).T
    e = jnp.where(e > 0, e, ALPHA * e)
    att = jax.nn.softmax(jnp.where(adj > 0, e, MASK_VALUE), axis=1)
    h_out = jax.nn.elu(att @ h)
    y = jax.nn.elu(h_out @ p["wout"] + p["bout"])
    z = y @ p["wmlp"] + p["bmlp"]
    return jax.nn.log_softmax(z, axis=1)


if __name__ == "__main__":
    # Small synthetic graph: N=128 nodes, nfeat=16, nhid=8, nclass=4, nheads=1.
    N, NFEAT, NHID, NCLASS = 128, 16, 8, 4
    key = jax.random.PRNGKey(0)
    kx, kadj, kp = jax.random.split(key, 3)

    x = jax.random.normal(kx, (N, NFEAT), jnp.float32)
    adj = (jax.random.uniform(kadj, (N, N)) > 0.7).astype(jnp.float32)
    adj = jnp.maximum(adj, jnp.eye(N, dtype=jnp.float32))   # self loops

    params = init_params(kp, NFEAT, NHID, NCLASS)

    out = gat_forward(x, adj, params)
    out = jax.block_until_ready(out)
    assert out.shape == (N, NCLASS) and out.dtype == jnp.float32

    # rows of log_softmax should exp-sum to ~1
    assert jnp.allclose(jnp.sum(jnp.exp(out), axis=1), 1.0, atol=1e-3)
    # match the pure-JAX reference (bf16 matmuls / softmax math inside kernel)
    ref = reference_forward(x, adj, params)
    assert float(jnp.max(jnp.abs(out - ref))) < 3e-2

    print("KERNEL_OK")
</pallas_src>

<mosaic_0001>
module attributes {stable_mosaic.version = 11 : i64} {
  func.func @_precompute_kernel(%arg0: i32, %arg1: memref<128x128xbf16, #tpu.memory_space<vmem>>, %arg2: memref<128x128xbf16, #tpu.memory_space<vmem>>, %arg3: memref<1x128xf32, #tpu.memory_space<vmem>>, %arg4: memref<128x128xbf16, #tpu.memory_space<vmem>>, %arg5: memref<128x1xf32, #tpu.memory_space<vmem>>) attributes {dimension_semantics = [#tpu.dimension_semantics<parallel>], iteration_bounds = array<i64: 1>, scalar_prefetch = 0 : i64, scratch_operands = 0 : i64, tpu.core_type = #tpu.core_type<tc>, window_params = [{transform_indices = @transform_0, window_bounds = array<i64: 128, 128>}, {pipeline_mode = #tpu.pipeline_mode<synchronous>, transform_indices = @transform_1, window_bounds = array<i64: 128, 128>}, {pipeline_mode = #tpu.pipeline_mode<synchronous>, transform_indices = @transform_2, window_bounds = array<i64: 1, 128>}, {transform_indices = @transform_3, window_bounds = array<i64: 128, 128>}, {transform_indices = @transform_4, window_bounds = array<i64: 128, 1>}]} {
    %c0 = arith.constant 0 : index
    %c0_0 = arith.constant 0 : index
    %0 = vector.load %arg1[%c0, %c0_0] : memref<128x128xbf16, #tpu.memory_space<vmem>>, vector<128x128xbf16>
    %c0_1 = arith.constant 0 : index
    %c0_2 = arith.constant 0 : index
    %1 = vector.load %arg2[%c0_1, %c0_2] : memref<128x128xbf16, #tpu.memory_space<vmem>>, vector<128x128xbf16>
    %cst = arith.constant dense<0.000000e+00> : vector<128x128xf32>
    %2 = tpu.matmul %0, %1, %cst {dimension_numbers = #tpu.dot_dimension_numbers<[1], [0], [0], [1], [0, 0, 1, 1], [], []>} : vector<128x128xbf16>, vector<128x128xbf16>, vector<128x128xf32> -> vector<128x128xf32>
    %c0_3 = arith.constant 0 : index
    %c0_4 = arith.constant 0 : index
    %3 = vector.load %arg3[%c0_3, %c0_4] : memref<1x128xf32, #tpu.memory_space<vmem>>, vector<1x128xf32>
    %4 = vector.broadcast %3 : vector<1x128xf32> to vector<128x128xf32>
    %5 = arith.mulf %2, %4 : vector<128x128xf32>
    %cst_5 = arith.constant dense<0.000000e+00> : vector<128xf32>
    %6 = vector.multi_reduction <add>, %5, %cst_5 [1] : vector<128x128xf32> to vector<128xf32>
    %7 = vector.shape_cast %6 : vector<128xf32> to vector<128x1xf32>
    %c0_6 = arith.constant 0 : index
    %c0_7 = arith.constant 0 : index
    %8 = vector.load %arg5[%c0_6, %c0_7] : memref<128x1xf32, #tpu.memory_space<vmem>>, vector<128x1xf32>
    tpu.vector_store %arg5[%c0_6, %c0_7], %7 {strides = array<i32>} : memref<128x1xf32, #tpu.memory_space<vmem>>, vector<128x1xf32>,
    %9 = arith.truncf %2 : vector<128x128xf32> to vector<128x128xbf16>
    %c0_8 = arith.constant 0 : index
    %c0_9 = arith.constant 0 : index
    %10 = vector.load %arg4[%c0_8, %c0_9] : memref<128x128xbf16, #tpu.memory_space<vmem>>, vector<128x128xbf16>
    tpu.vector_store %arg4[%c0_8, %c0_9], %9 {strides = array<i32>} : memref<128x128xbf16, #tpu.memory_space<vmem>>, vector<128x128xbf16>,
    return
  }
  func.func @transform_0(%arg0: i32) -> (i32, i32) {
    %c0_i32 = arith.constant 0 : i32
    %c0_i32_0 = arith.constant 0 : i32
    return %arg0, %c0_i32 : i32, i32
  }
  func.func @transform_1(%arg0: i32) -> (i32, i32) {
    %c0_i32 = arith.constant 0 : i32
    %c0_i32_0 = arith.constant 0 : i32
    %c0_i32_1 = arith.constant 0 : i32
    return %c0_i32, %c0_i32_0 : i32, i32
  }
  func.func @transform_2(%arg0: i32) -> (i32, i32) {
    %c0_i32 = arith.constant 0 : i32
    %c0_i32_0 = arith.constant 0 : i32
    %c0_i32_1 = arith.constant 0 : i32
    return %c0_i32, %c0_i32_0 : i32, i32
  }
  func.func @transform_3(%arg0: i32) -> (i32, i32) {
    %c0_i32 = arith.constant 0 : i32
    %c0_i32_0 = arith.constant 0 : i32
    return %arg0, %c0_i32 : i32, i32
  }
  func.func @transform_4(%arg0: i32) -> (i32, i32) {
    %c0_i32 = arith.constant 0 : i32
    %c0_i32_0 = arith.constant 0 : i32
    return %arg0, %c0_i32 : i32, i32
  }
}

module attributes {stable_mosaic.version = 11 : i64} {
  func.func @_precompute_kernel(%arg0: i32, %arg1: memref<128x128xbf16, #tpu.memory_space<vmem>>, %arg2: memref<128x128xbf16, #tpu.memory_space<vmem>>, %arg3: memref<1x128xf32, #tpu.memory_space<vmem>>, %arg4: memref<128x128xbf16, #tpu.memory_space<vmem>>, %arg5: memref<128x1xf32, #tpu.memory_space<vmem>>) attributes {dimension_semantics = [#tpu.dimension_semantics<parallel>], iteration_bounds = array<i64: 1>, scalar_prefetch = 0 : i64, scratch_operands = 0 : i64, tpu.core_type = #tpu.core_type<tc>, window_params = [{transform_indices = @transform_0, window_bounds = array<i64: 128, 128>}, {pipeline_mode = #tpu.pipeline_mode<synchronous>, transform_indices = @transform_1, window_bounds = array<i64: 128, 128>}, {pipeline_mode = #tpu.pipeline_mode<synchronous>, transform_indices = @transform_2, window_bounds = array<i64: 1, 128>}, {transform_indices = @transform_3, window_bounds = array<i64: 128, 128>}, {transform_indices = @transform_4, window_bounds = array<i64: 128, 1>}]} {
    %c0 = arith.constant 0 : index
    %c0_0 = arith.constant 0 : index
    %0 = vector.load %arg1[%c0, %c0_0] : memref<128x128xbf16, #tpu.memory_space<vmem>>, vector<128x128xbf16>
    %c0_1 = arith.constant 0 : index
    %c0_2 = arith.constant 0 : index
    %1 = vector.load %arg2[%c0_1, %c0_2] : memref<128x128xbf16, #tpu.memory_space<vmem>>, vector<128x128xbf16>
    %cst = arith.constant dense<0.000000e+00> : vector<128x128xf32>
    %2 = tpu.matmul %0, %1, %cst {dimension_numbers = #tpu.dot_dimension_numbers<[1], [0], [0], [1], [0, 0, 1, 1], [], []>} : vector<128x128xbf16>, vector<128x128xbf16>, vector<128x128xf32> -> vector<128x128xf32>
    %c0_3 = arith.constant 0 : index
    %c0_4 = arith.constant 0 : index
    %3 = vector.load %arg3[%c0_3, %c0_4] : memref<1x128xf32, #tpu.memory_space<vmem>>, vector<1x128xf32>
    %4 = vector.broadcast %3 : vector<1x128xf32> to vector<128x128xf32>
    %5 = arith.mulf %2, %4 : vector<128x128xf32>
    %cst_5 = arith.constant dense<0.000000e+00> : vector<128xf32>
    %6 = vector.multi_reduction <add>, %5, %cst_5 [1] : vector<128x128xf32> to vector<128xf32>
    %7 = vector.shape_cast %6 : vector<128xf32> to vector<128x1xf32>
    %c0_6 = arith.constant 0 : index
    %c0_7 = arith.constant 0 : index
    %8 = vector.load %arg5[%c0_6, %c0_7] : memref<128x1xf32, #tpu.memory_space<vmem>>, vector<128x1xf32>
    tpu.vector_store %arg5[%c0_6, %c0_7], %7 {strides = array<i32>} : memref<128x1xf32, #tpu.memory_space<vmem>>, vector<128x1xf32>,
    %9 = arith.truncf %2 : vector<128x128xf32> to vector<128x128xbf16>
    %c0_8 = arith.constant 0 : index
    %c0_9 = arith.constant 0 : index
    %10 = vector.load %arg4[%c0_8, %c0_9] : memref<128x128xbf16, #tpu.memory_space<vmem>>, vector<128x128xbf16>
    tpu.vector_store %arg4[%c0_8, %c0_9], %9 {strides = array<i32>} : memref<128x128xbf16, #tpu.memory_space<vmem>>, vector<128x128xbf16>,
    return
  }
  func.func @transform_0(%arg0: i32) -> (i32, i32) {
    %c0_i32 = arith.constant 0 : i32
    %c0_i32_0 = arith.constant 0 : i32
    return %arg0, %c0_i32 : i32, i32
  }
  func.func @transform_1(%arg0: i32) -> (i32, i32) {
    %c0_i32 = arith.constant 0 : i32
    %c0_i32_0 = arith.constant 0 : i32
    %c0_i32_1 = arith.constant 0 : i32
    return %c0_i32, %c0_i32_0 : i32, i32
  }
  func.func @transform_2(%arg0: i32) -> (i32, i32) {
    %c0_i32 = arith.constant 0 : i32
    %c0_i32_0 = arith.constant 0 : i32
    %c0_i32_1 = arith.constant 0 : i32
    return %c0_i32, %c0_i32_0 : i32, i32
  }
  func.func @transform_3(%arg0: i32) -> (i32, i32) {
    %c0_i32 = arith.constant 0 : i32
    %c0_i32_0 = arith.constant 0 : i32
    return %arg0, %c0_i32 : i32, i32
  }
  func.func @transform_4(%arg0: i32) -> (i32, i32) {
    %c0_i32 = arith.constant 0 : i32
    %c0_i32_0 = arith.constant 0 : i32
    return %arg0, %c0_i32 : i32, i32
  }
}

</mosaic_0001>

<llo_original>
// kernel: tpu_custom_call.1
$region0: #{tpu_custom_call.1}
  #allocation0 [shape = 'u32[]', space=smem, size = 0x4, offset = 0x4, fixed_abs, tag = 'smem constant byte address 0x4 - core index']
  #allocation1 [shape = 'u32[144,128]{1,0:T(1,128)}', space=vmem, size = 0x12000, scoped, tag = 'internal scratch']
  %s0 = inlined_call_operand.hbm [shape: bf16[128,128], index: 0, kind: input, shape index: {}]
  %s1 = inlined_call_operand.hbm [shape: bf16[128,128], index: 1, kind: input, shape index: {}]
  %s2 = inlined_call_operand.vmem [shape: f32[1,128], index: 2, kind: input, shape index: {}]
  %s3 = inlined_call_operand.hbm [shape: bf16[128,128], index: 3, kind: output, shape index: {0}]
  %s4 = inlined_call_operand.vmem [shape: f32[128,1], index: 4, kind: output, shape index: {1}]
  %5 = xla_tuple %s3, %s4
  %s6 = sld [smem:[#allocation0]]
  $region38: #{tpu_custom_call.1} parent=0
    _
  %s8 = ssub.s32 1, %s6
  %s9 = scalar_select 0, %s8, %s6
  $region1: #{tpu_custom_call.1} parent=0
    #allocation2 [shape = 'u8[32768]{0}', space=vmem, size = 0x8000, scoped, tag = 'input window, operand 0, single buffered']
    #allocation3 [shape = 's32[1]{0}', space=sflag, size = 0x4, scoped, tag = 'scoped memory for tpu_custom_call.1']
    #allocation4 [shape = 's32[1]{0}', space=sflag, size = 0x4, scoped, tag = 'scoped memory for tpu_custom_call.1']
    #allocation5 [shape = 'u8[32768]{0}', space=vmem, size = 0x8000, scoped, tag = 'input window, operand 1, single buffered']
    #allocation6 [shape = 's32[1]{0}', space=sflag, size = 0x4, scoped, tag = 'scoped memory for tpu_custom_call.1']
    #allocation7 [shape = 'u8[32768]{0}', space=vmem, size = 0x8000, scoped, tag = 'output window, operand 0, single buffered']
    %10 = vsyncpa [#allocation3], 0
    %11 = vsyncpa [#allocation6], 0
    %12 = vsyncpa [#allocation4], 0
    // Predicated region
    $region2: #{tpu_custom_call.1} parent=1 // pred_check
      _
    $region3: #{tpu_custom_call.1} parent=1 // pred_check_branch
      %14 = sbr.rel (0) target = $region5
    $region4: #{tpu_custom_call.1} parent=1 // pred_region
      %s16 = ssub.s32 1024, 1024
      %17 = vsyncadd [#allocation3], %s16
      %s18 = sshll.u32 [#allocation2], 4
      %s19 = int_to_ptr.vmem [resolvable:$true] %s18
      %24 = dma.hbm_to_vmem [thread:$0]  %s0, 1024, %s19, [#allocation3], 64, 64, 4
    $region5: #{tpu_custom_call.1} parent=1 // pred_fallthru
      _
    // Predicated region
    $region6: #{tpu_custom_call.1} parent=1 // pred_check
      _
    $region7: #{tpu_custom_call.1} parent=1 // pred_check_branch
      %26 = sbr.rel (0) target = $region9
    $region8: #{tpu_custom_call.1} parent=1 // pred_region
      %s28 = ssub.s32 1024, 1024
      %29 = vsyncadd [#allocation6], %s28
      %s30 = sshll.u32 [#allocation5], 4
      %s31 = int_to_ptr.vmem [resolvable:$true] %s30
      %36 = dma.hbm_to_vmem [thread:$0]  %s1, 1024, %s31, [#allocation6], 64, 64, 4
    $region9: #{tpu_custom_call.1} parent=1 // pred_fallthru
      _
    // Predicated region
    $region10: #{tpu_custom_call.1} parent=1 // pred_check
      _
    $region11: #{tpu_custom_call.1} parent=1 // pred_check_branch
      %38 = sbr.rel (0) target = $region13
    $region12: #{tpu_custom_call.1} parent=1 // pred_region
      _
    $region13: #{tpu_custom_call.1} parent=1 // pred_fallthru
      _
    // Predicated region
    $region14: #{tpu_custom_call.1} parent=1 // pred_check
      _
    $region15: #{tpu_custom_call.1} parent=1 // pred_check_branch
      %40 = sbr.rel (0) target = $region17
    $region16: #{tpu_custom_call.1} parent=1 // pred_region
      %41 = dma.done [#allocation3], 1024
    $region17: #{tpu_custom_call.1} parent=1 // pred_fallthru
      _
    // Predicated region
    $region18: #{tpu_custom_call.1} parent=1 // pred_check
      _
    $region19: #{tpu_custom_call.1} parent=1 // pred_check_branch
      %43 = sbr.rel (0) target = $region21
    $region20: #{tpu_custom_call.1} parent=1 // pred_region
      %44 = dma.done [#allocation6], 1024
    $region21: #{tpu_custom_call.1} parent=1 // pred_fallthru
      _
    %v46 = vld [vmem:[#allocation2] sm:$0xf]
    %v47 = vld [vmem:[#allocation2 + $0x4] sm:$0xf]
    %v48 = vld [vmem:[#allocation2 + $0x8] sm:$0xf]
    %v49 = vld [vmem:[#allocation2 + $0xc] sm:$0xf]
    %v50 = vld [vmem:[#allocation2 + $0x10] sm:$0xf]
    %v51 = vld [vmem:[#allocation2 + $0x14] sm:$0xf]
    %v52 = vld [vmem:[#allocation2 + $0x18] sm:$0xf]
    %v53 = vld [vmem:[#allocation2 + $0x1c] sm:$0xf]
    %v54 = vld [vmem:[#allocation2 + $0x20] sm:$0xf]
    %v55 = vld [vmem:[#allocation2 + $0x24] sm:$0xf]
    %v56 = vld [vmem:[#allocation2 + $0x28] sm:$0xf]
    %v57 = vld [vmem:[#allocation2 + $0x2c] sm:$0xf]
    %v58 = vld [vmem:[#allocation2 + $0x30] sm:$0xf]
    %v59 = vld [vmem:[#allocation2 + $0x34] sm:$0xf]
    %v60 = vld [vmem:[#allocation2 + $0x38] sm:$0xf]
    %v61 = vld [vmem:[#allocation2 + $0x3c] sm:$0xf]
    %v62 = vld [vmem:[#allocation5] sm:$0xf]
    %v63 = vld [vmem:[#allocation5 + $0x4] sm:$0xf]
    %v64 = vld [vmem:[#allocation5 + $0x8] sm:$0xf]
    %v65 = vld [vmem:[#allocation5 + $0xc] sm:$0xf]
    %v66 = vld [vmem:[#allocation5 + $0x10] sm:$0xf]
    %v67 = vld [vmem:[#allocation5 + $0x14] sm:$0xf]
    %v68 = vld [vmem:[#allocation5 + $0x18] sm:$0xf]
    %v69 = vld [vmem:[#allocation5 + $0x1c] sm:$0xf]
    %v70 = vld [vmem:[#allocation5 + $0x20] sm:$0xf]
    %v71 = vld [vmem:[#allocation5 + $0x24] sm:$0xf]
    %v72 = vld [vmem:[#allocation5 + $0x28] sm:$0xf]
    %v73 = vld [vmem:[#allocation5 + $0x2c] sm:$0xf]
    %v74 = vld [vmem:[#allocation5 + $0x30] sm:$0xf]
    %v75 = vld [vmem:[#allocation5 + $0x34] sm:$0xf]
    %v76 = vld [vmem:[#allocation5 + $0x38] sm:$0xf]
    %v77 = vld [vmem:[#allocation5 + $0x3c] sm:$0xf]
    %v94 = vunpack.c.l.b16 %v46
    %v95 = vunpack.c.l.b16 %v47
    %v96 = vunpack.c.l.b16 %v48
    %v97 = vunpack.c.l.b16 %v49
    %v98 = vunpack.c.l.b16 %v50
    %v99 = vunpack.c.l.b16 %v51
    %v100 = vunpack.c.l.b16 %v52
    %v101 = vunpack.c.l.b16 %v53
    %v102 = vunpack.c.l.b16 %v54
    %v103 = vunpack.c.l.b16 %v55
    %v104 = vunpack.c.l.b16 %v56
    %v105 = vunpack.c.l.b16 %v57
    %v106 = vunpack.c.l.b16 %v58
    %v107 = vunpack.c.l.b16 %v59
    %v108 = vunpack.c.l.b16 %v60
    %v109 = vunpack.c.l.b16 %v61
    %v110 = vpack.c.b16 %v95, %v94
    %v111 = vpack.c.b16 %v97, %v96
    %v112 = vpack.c.b16 %v99, %v98
    %v113 = vpack.c.b16 %v101, %v100
    %v114 = vpack.c.b16 %v103, %v102
    %v115 = vpack.c.b16 %v105, %v104
    %v116 = vpack.c.b16 %v107, %v106
    %v117 = vpack.c.b16 %v109, %v108
    %v142 = vunpack.c.l.b16 %v62
    %v143 = vunpack.c.l.b16 %v63
    %v144 = vunpack.c.l.b16 %v64
    %v145 = vunpack.c.l.b16 %v65
    %v146 = vunpack.c.l.b16 %v66
    %v147 = vunpack.c.l.b16 %v67
    %v148 = vunpack.c.l.b16 %v68
    %v149 = vunpack.c.l.b16 %v69
    %v150 = vunpack.c.l.b16 %v70
    %v151 = vunpack.c.l.b16 %v71
    %v152 = vunpack.c.l.b16 %v72
    %v153 = vunpack.c.l.b16 %v73
    %v154 = vunpack.c.l.b16 %v74
    %v155 = vunpack.c.l.b16 %v75
    %v156 = vunpack.c.l.b16 %v76
    %v157 = vunpack.c.l.b16 %v77
    %v158 = vpack.c.b16 %v143, %v142
    %v159 = vpack.c.b16 %v145, %v144
    %v160 = vpack.c.b16 %v147, %v146
    %v161 = vpack.c.b16 %v149, %v148
    %v162 = vpack.c.b16 %v151, %v150
    %v163 = vpack.c.b16 %v153, %v152
    %v164 = vpack.c.b16 %v155, %v154
    %v165 = vpack.c.b16 %v157, %v156
    %174 = vmatprep.subr.bf16.mxu0 0
    %175 = vmatpush1.bf16.msra.mxu0 %v165
    %176 = vmatprep.subr.bf16.mxu0 0
    %177 = vmatpush1.bf16.msra.mxu0 %v164
    %178 = vmatprep.subr.bf16.mxu0 0
    %179 = vmatpush1.bf16.msra.mxu0 %v163
    %180 = vmatprep.subr.bf16.mxu0 0
    %181 = vmatpush1.bf16.msra.mxu0 %v162
    %182 = vmatprep.subr.bf16.mxu0 0
    %183 = vmatpush1.bf16.msra.mxu0 %v161
    %184 = vmatprep.subr.bf16.mxu0 0
    %185 = vmatpush1.bf16.msra.mxu0 %v160
    %186 = vmatprep.subr.bf16.mxu0 0
    %187 = vmatpush1.bf16.msra.mxu0 %v159
    %188 = vmatprep.subr.bf16.mxu0 0
    %189 = vmatpush1.bf16.msra.mxu0 %v158
    %190 = vmatprep.subr.bf16.mxu0 0
    %191 = vmatpush2.bf16.msra.mxu0 0
    %192 = vmatprep.subr.bf16.mxu0 0
    %193 = vmatpush2.bf16.msra.mxu0 0
    %194 = vmatprep.subr.bf16.mxu0 0
    %195 = vmatpush2.bf16.msra.mxu0 0
    %196 = vmatprep.subr.bf16.mxu0 0
    %197 = vmatpush2.bf16.msra.mxu0 0
    %198 = vmatprep.subr.bf16.mxu0 0
    %199 = vmatpush2.bf16.msra.mxu0 0
    %200 = vmatprep.subr.bf16.mxu0 0
    %201 = vmatpush2.bf16.msra.mxu0 0
    %202 = vmatprep.subr.bf16.mxu0 0
    %203 = vmatpush2.bf16.msra.mxu0 0
    %204 = vmatprep.subr.bf16.mxu0 0
    %205 = vmatpush2.bf16.msra.mxu0 0
    %206 = vmatprep.mubr.bf16.mxu0 0
    %207 = vmatmul.mubr.bf16.gmra.mxu0 %v110
    %v208 = vpop.f32.mrf.mxu0
    %v209 = vadd.f32 0.0, %v208
    %v210 = vpop.f32.mrf.mxu0
    %v211 = vpop.f32.mrf.mxu0
    %v212 = vadd.f32 0.0, %v211
    %v213 = vpop.f32.mrf.mxu0
    %214 = vmatprep.mubr.bf16.mxu0 0
    %215 = vmatmul.mubr.bf16.gmra.mxu0 %v111
    %v216 = vpop.f32.mrf.mxu0
    %v217 = vadd.f32 0.0, %v216
    %v218 = vpop.f32.mrf.mxu0
    %v219 = vpop.f32.mrf.mxu0
    %v220 = vadd.f32 0.0, %v219
    %v221 = vpop.f32.mrf.mxu0
    %222 = vmatprep.mubr.bf16.mxu0 0
    %223 = vmatmul.mubr.bf16.gmra.mxu0 %v112
    %v224 = vpop.f32.mrf.mxu0
    %v225 = vadd.f32 0.0, %v224
    %v226 = vpop.f32.mrf.mxu0
    %v227 = vpop.f32.mrf.mxu0
    %v228 = vadd.f32 0.0, %v227
    %v229 = vpop.f32.mrf.mxu0
    %230 = vmatprep.mubr.bf16.mxu0 0
    %231 = vmatmul.mubr.bf16.gmra.mxu0 %v113
    %v232 = vpop.f32.mrf.mxu0
    %v233 = vadd.f32 0.0, %v232
    %v234 = vpop.f32.mrf.mxu0
    %v235 = vpop.f32.mrf.mxu0
    %v236 = vadd.f32 0.0, %v235
    %v237 = vpop.f32.mrf.mxu0
    %238 = vmatprep.mubr.bf16.mxu0 0
    %239 = vmatmul.mubr.bf16.gmra.mxu0 %v114
    %v240 = vpop.f32.mrf.mxu0
    %v241 = vadd.f32 0.0, %v240
    %v242 = vpop.f32.mrf.mxu0
    %v243 = vpop.f32.mrf.mxu0
    %v244 = vadd.f32 0.0, %v243
    %v245 = vpop.f32.mrf.mxu0
    %246 = vmatprep.mubr.bf16.mxu0 0
    %247 = vmatmul.mubr.bf16.gmra.mxu0 %v115
    %v248 = vpop.f32.mrf.mxu0
    %v249 = vadd.f32 0.0, %v248
    %v250 = vpop.f32.mrf.mxu0
    %v251 = vpop.f32.mrf.mxu0
    %v252 = vadd.f32 0.0, %v251
    %v253 = vpop.f32.mrf.mxu0
    %254 = vmatprep.mubr.bf16.mxu0 0
    %255 = vmatmul.mubr.bf16.gmra.mxu0 %v116
    %v256 = vpop.f32.mrf.mxu0
    %v257 = vadd.f32 0.0, %v256
    %v258 = vpop.f32.mrf.mxu0
    %v259 = vpop.f32.mrf.mxu0
    %v260 = vadd.f32 0.0, %v259
    %v261 = vpop.f32.mrf.mxu0
    %262 = vmatprep.mubr.bf16.mxu0 0
    %263 = vmatmul.mubr.bf16.gmra.mxu0 %v117
    %v264 = vpop.f32.mrf.mxu0
    %v265 = vadd.f32 0.0, %v264
    %v266 = vpop.f32.mrf.mxu0
    %v267 = vpop.f32.mrf.mxu0
    %v268 = vadd.f32 0.0, %v267
    %v269 = vpop.f32.mrf.mxu0
    %270 = vdwg.mxu0
    %v271 = vld [vmem:[%s2] sm:$0x1]
    %v273 = vlaneseq
    %v274 = vshrl.u32 %v273, 7
    %v275 = vsub.s32 0, %v274
    %v276 = vrot.slane %v271, %v275
    %v278 = vmul.f32 %v209, %v276
    %v279 = vmul.f32 %v212, %v276
    %v280 = vmul.f32 %v217, %v276
    %v281 = vmul.f32 %v220, %v276
    %v282 = vmul.f32 %v225, %v276
    %v283 = vmul.f32 %v228, %v276
    %v284 = vmul.f32 %v233, %v276
    %v285 = vmul.f32 %v236, %v276
    %v286 = vmul.f32 %v241, %v276
    %v287 = vmul.f32 %v244, %v276
    %v288 = vmul.f32 %v249, %v276
    %v289 = vmul.f32 %v252, %v276
    %v290 = vmul.f32 %v257, %v276
    %v291 = vmul.f32 %v260, %v276
    %v292 = vmul.f32 %v265, %v276
    %v293 = vmul.f32 %v268, %v276
    %294 = vadd.xlane.f32.xlu0 %v278
    %v295 = vpop.xlane.xlu0 %294
    %296 = vadd.xlane.f32.xlu0 %v279
    %v297 = vpop.xlane.xlu0 %296
    %298 = vadd.xlane.f32.xlu0 %v280
    %v299 = vpop.xlane.xlu0 %298
    %300 = vadd.xlane.f32.xlu0 %v281
    %v301 = vpop.xlane.xlu0 %300
    %302 = vadd.xlane.f32.xlu0 %v282
    %v303 = vpop.xlane.xlu0 %302
    %304 = vadd.xlane.f32.xlu0 %v283
    %v305 = vpop.xlane.xlu0 %304
    %306 = vadd.xlane.f32.xlu0 %v284
    %v307 = vpop.xlane.xlu0 %306
    %308 = vadd.xlane.f32.xlu0 %v285
    %v309 = vpop.xlane.xlu0 %308
    %310 = vadd.xlane.f32.xlu0 %v286
    %v311 = vpop.xlane.xlu0 %310
    %312 = vadd.xlane.f32.xlu0 %v287
    %v313 = vpop.xlane.xlu0 %312
    %314 = vadd.xlane.f32.xlu0 %v288
    %v315 = vpop.xlane.xlu0 %314
    %316 = vadd.xlane.f32.xlu0 %v289
    %v317 = vpop.xlane.xlu0 %316
    %318 = vadd.xlane.f32.xlu0 %v290
    %v319 = vpop.xlane.xlu0 %318
    %320 = vadd.xlane.f32.xlu0 %v291
    %v321 = vpop.xlane.xlu0 %320
    %322 = vadd.xlane.f32.xlu0 %v292
    %v323 = vpop.xlane.xlu0 %322
    %324 = vadd.xlane.f32.xlu0 %v293
    %v325 = vpop.xlane.xlu0 %324
    %vm326 = vcmask 7168
    %327 = vst.msk [vmem:[%s4] sm:$0xff] %vm326, %v295
    %328 = vst.msk [vmem:[%s4 + $0x8] sm:$0xff] %vm326, %v297
    %329 = vst.msk [vmem:[%s4 + $0x10] sm:$0xff] %vm326, %v299
    %330 = vst.msk [vmem:[%s4 + $0x18] sm:$0xff] %vm326, %v301
    %331 = vst.msk [vmem:[%s4 + $0x20] sm:$0xff] %vm326, %v303
    %332 = vst.msk [vmem:[%s4 + $0x28] sm:$0xff] %vm326, %v305
    %333 = vst.msk [vmem:[%s4 + $0x30] sm:$0xff] %vm326, %v307
    %334 = vst.msk [vmem:[%s4 + $0x38] sm:$0xff] %vm326, %v309
    %335 = vst.msk [vmem:[%s4 + $0x40] sm:$0xff] %vm326, %v311
    %336 = vst.msk [vmem:[%s4 + $0x48] sm:$0xff] %vm326, %v313
    %337 = vst.msk [vmem:[%s4 + $0x50] sm:$0xff] %vm326, %v315
    %338 = vst.msk [vmem:[%s4 + $0x58] sm:$0xff] %vm326, %v317
    %339 = vst.msk [vmem:[%s4 + $0x60] sm:$0xff] %vm326, %v319
    %340 = vst.msk [vmem:[%s4 + $0x68] sm:$0xff] %vm326, %v321
    %341 = vst.msk [vmem:[%s4 + $0x70] sm:$0xff] %vm326, %v323
    %342 = vst.msk [vmem:[%s4 + $0x78] sm:$0xff] %vm326, %v325
    %v343 = vpack.c.bf16 %v212, %v209
    %v344 = vpack.c.bf16 %v220, %v217
    %v345 = vpack.c.bf16 %v228, %v225
    %v346 = vpack.c.bf16 %v236, %v233
    %v347 = vpack.c.bf16 %v244, %v241
    %v348 = vpack.c.bf16 %v252, %v249
    %v349 = vpack.c.bf16 %v260, %v257
    %v350 = vpack.c.bf16 %v268, %v265
    %v359 = vunpack.c.l.b16 %v343
    %v360 = vunpack.c.h.b16 %v343
    %v361 = vunpack.c.l.b16 %v344
    %v362 = vunpack.c.h.b16 %v344
    %v363 = vunpack.c.l.b16 %v345
    %v364 = vunpack.c.h.b16 %v345
    %v365 = vunpack.c.l.b16 %v346
    %v366 = vunpack.c.h.b16 %v346
    %v367 = vunpack.c.l.b16 %v347
    %v368 = vunpack.c.h.b16 %v347
    %v369 = vunpack.c.l.b16 %v348
    %v370 = vunpack.c.h.b16 %v348
    %v371 = vunpack.c.l.b16 %v349
    %v372 = vunpack.c.h.b16 %v349
    %v373 = vunpack.c.l.b16 %v350
    %v374 = vunpack.c.h.b16 %v350
    %v375 = vpack.c.b16 %v359, %v359
    %v376 = vpack.c.b16 %v360, %v360
    %v377 = vpack.c.b16 %v361, %v361
    %v378 = vpack.c.b16 %v362, %v362
    %v379 = vpack.c.b16 %v363, %v363
    %v380 = vpack.c.b16 %v364, %v364
    %v381 = vpack.c.b16 %v365, %v365
    %v382 = vpack.c.b16 %v366, %v366
    %v383 = vpack.c.b16 %v367, %v367
    %v384 = vpack.c.b16 %v368, %v368
    %v385 = vpack.c.b16 %v369, %v369
    %v386 = vpack.c.b16 %v370, %v370
    %v387 = vpack.c.b16 %v371, %v371
    %v388 = vpack.c.b16 %v372, %v372
    %v389 = vpack.c.b16 %v373, %v373
    %v390 = vpack.c.b16 %v374, %v374
    %407 = vst [vmem:[#allocation7] sm:$0xf] %v375
    %408 = vst [vmem:[#allocation7 + $0x4] sm:$0xf] %v376
    %409 = vst [vmem:[#allocation7 + $0x8] sm:$0xf] %v377
    %410 = vst [vmem:[#allocation7 + $0xc] sm:$0xf] %v378
    %411 = vst [vmem:[#allocation7 + $0x10] sm:$0xf] %v379
    %412 = vst [vmem:[#allocation7 + $0x14] sm:$0xf] %v380
    %413 = vst [vmem:[#allocation7 + $0x18] sm:$0xf] %v381
    %414 = vst [vmem:[#allocation7 + $0x1c] sm:$0xf] %v382
    %415 = vst [vmem:[#allocation7 + $0x20] sm:$0xf] %v383
    %416 = vst [vmem:[#allocation7 + $0x24] sm:$0xf] %v384
    %417 = vst [vmem:[#allocation7 + $0x28] sm:$0xf] %v385
    %418 = vst [vmem:[#allocation7 + $0x2c] sm:$0xf] %v386
    %419 = vst [vmem:[#allocation7 + $0x30] sm:$0xf] %v387
    %420 = vst [vmem:[#allocation7 + $0x34] sm:$0xf] %v388
    %421 = vst [vmem:[#allocation7 + $0x38] sm:$0xf] %v389
    %422 = vst [vmem:[#allocation7 + $0x3c] sm:$0xf] %v390
    // Predicated region
    $region22: #{tpu_custom_call.1} parent=1 // pred_check
      _
    $region23: #{tpu_custom_call.1} parent=1 // pred_check_branch
      %424 = sbr.rel (0) target = $region25
    $region24: #{tpu_custom_call.1} parent=1 // pred_region
      %s426 = ssub.s32 1024, 1024
      %427 = vsyncadd [#allocation4], %s426
      %s428 = sshll.u32 [#allocation7], 4
      %s429 = int_to_ptr.vmem [resolvable:$true] %s428
      %434 = dma.vmem_to_hbm [thread:$0]  %s429, 1024, %s3, [#allocation4], 64, 64, 4
    $region25: #{tpu_custom_call.1} parent=1 // pred_fallthru
      _
    // Predicated region
    $region26: #{tpu_custom_call.1} parent=1 // pred_check
      _
    $region27: #{tpu_custom_call.1} parent=1 // pred_check_branch
      %436 = sbr.rel (0) target = $region29
    $region28: #{tpu_custom_call.1} parent=1 // pred_region
      _
    $region29: #{tpu_custom_call.1} parent=1 // pred_fallthru
      _
    // Predicated region
    $region30: #{tpu_custom_call.1} parent=1 // pred_check
      _
    $region31: #{tpu_custom_call.1} parent=1 // pred_check_branch
      %438 = sbr.rel (0) target = $region33
    $region32: #{tpu_custom_call.1} parent=1 // pred_region
      %439 = dma.done [#allocation4], 1024
    $region33: #{tpu_custom_call.1} parent=1 // pred_fallthru
      _
    // Predicated region
    $region34: #{tpu_custom_call.1} parent=1 // pred_check
      _
    $region35: #{tpu_custom_call.1} parent=1 // pred_check_branch
      %441 = sbr.rel (0) target = $region37
    $region36: #{tpu_custom_call.1} parent=1 // pred_region
      _
    $region37: #{tpu_custom_call.1} parent=1 // pred_fallthru
      _
    %442 = vsyncpa [#allocation3], 1
    %443 = vsyncpa [#allocation6], 1
    %444 = vsyncpa [#allocation4], 1

// kernel: tpu_custom_call.1
$region0: #{tpu_custom_call.1}
  #allocation0 [shape = 'u32[]', space=smem, size = 0x4, offset = 0x4, fixed_abs, tag = 'smem constant byte address 0x4 - core index']
  #allocation1 [shape = 'u32[144,128]{1,0:T(1,128)}', space=vmem, size = 0x12000, scoped, tag = 'internal scratch']
  %s0 = inlined_call_operand.hbm [shape: bf16[128,128], index: 0, kind: input, shape index: {}]
  %s1 = inlined_call_operand.hbm [shape: bf16[128,128], index: 1, kind: input, shape index: {}]
  %s2 = inlined_call_operand.vmem [shape: f32[1,128], index: 2, kind: input, shape index: {}]
  %s3 = inlined_call_operand.hbm [shape: bf16[128,128], index: 3, kind: output, shape index: {0}]
  %s4 = inlined_call_operand.vmem [shape: f32[128,1], index: 4, kind: output, shape index: {1}]
  %5 = xla_tuple %s3, %s4
  %s6 = sld [smem:[#allocation0]]
  $region38: #{tpu_custom_call.1} parent=0
    _
  %s8 = ssub.s32 1, %s6
  %s9 = scalar_select 0, %s8, %s6
  $region1: #{tpu_custom_call.1} parent=0
    #allocation2 [shape = 'u8[32768]{0}', space=vmem, size = 0x8000, scoped, tag = 'input window, operand 0, single buffered']
    #allocation3 [shape = 's32[1]{0}', space=sflag, size = 0x4, scoped, tag = 'scoped memory for tpu_custom_call.1']
    #allocation4 [shape = 's32[1]{0}', space=sflag, size = 0x4, scoped, tag = 'scoped memory for tpu_custom_call.1']
    #allocation5 [shape = 'u8[32768]{0}', space=vmem, size = 0x8000, scoped, tag = 'input window, operand 1, single buffered']
    #allocation6 [shape = 's32[1]{0}', space=sflag, size = 0x4, scoped, tag = 'scoped memory for tpu_custom_call.1']
    #allocation7 [shape = 'u8[32768]{0}', space=vmem, size = 0x8000, scoped, tag = 'output window, operand 0, single buffered']
    %10 = vsyncpa [#allocation3], 0
    %11 = vsyncpa [#allocation6], 0
    %12 = vsyncpa [#allocation4], 0
    // Predicated region
    $region2: #{tpu_custom_call.1} parent=1 // pred_check
      _
    $region3: #{tpu_custom_call.1} parent=1 // pred_check_branch
      %14 = sbr.rel (0) target = $region5
    $region4: #{tpu_custom_call.1} parent=1 // pred_region
      %s16 = ssub.s32 1024, 1024
      %17 = vsyncadd [#allocation3], %s16
      %s18 = sshll.u32 [#allocation2], 4
      %s19 = int_to_ptr.vmem [resolvable:$true] %s18
      %24 = dma.hbm_to_vmem [thread:$0]  %s0, 1024, %s19, [#allocation3], 64, 64, 4
    $region5: #{tpu_custom_call.1} parent=1 // pred_fallthru
      _
    // Predicated region
    $region6: #{tpu_custom_call.1} parent=1 // pred_check
      _
    $region7: #{tpu_custom_call.1} parent=1 // pred_check_branch
      %26 = sbr.rel (0) target = $region9
    $region8: #{tpu_custom_call.1} parent=1 // pred_region
      %s28 = ssub.s32 1024, 1024
      %29 = vsyncadd [#allocation6], %s28
      %s30 = sshll.u32 [#allocation5], 4
      %s31 = int_to_ptr.vmem [resolvable:$true] %s30
      %36 = dma.hbm_to_vmem [thread:$0]  %s1, 1024, %s31, [#allocation6], 64, 64, 4
    $region9: #{tpu_custom_call.1} parent=1 // pred_fallthru
      _
    // Predicated region
    $region10: #{tpu_custom_call.1} parent=1 // pred_check
      _
    $region11: #{tpu_custom_call.1} parent=1 // pred_check_branch
      %38 = sbr.rel (0) target = $region13
    $region12: #{tpu_custom_call.1} parent=1 // pred_region
      _
    $region13: #{tpu_custom_call.1} parent=1 // pred_fallthru
      _
    // Predicated region
    $region14: #{tpu_custom_call.1} parent=1 // pred_check
      _
    $region15: #{tpu_custom_call.1} parent=1 // pred_check_branch
      %40 = sbr.rel (0) target = $region17
    $region16: #{tpu_custom_call.1} parent=1 // pred_region
      %41 = dma.done [#allocation3], 1024
    $region17: #{tpu_custom_call.1} parent=1 // pred_fallthru
      _
    // Predicated region
    $region18: #{tpu_custom_call.1} parent=1 // pred_check
      _
    $region19: #{tpu_custom_call.1} parent=1 // pred_check_branch
      %43 = sbr.rel (0) target = $region21
    $region20: #{tpu_custom_call.1} parent=1 // pred_region
      %44 = dma.done [#allocation6], 1024
    $region21: #{tpu_custom_call.1} parent=1 // pred_fallthru
      _
    %v46 = vld [vmem:[#allocation2] sm:$0xf]
    %v47 = vld [vmem:[#allocation2 + $0x4] sm:$0xf]
    %v48 = vld [vmem:[#allocation2 + $0x8] sm:$0xf]
    %v49 = vld [vmem:[#allocation2 + $0xc] sm:$0xf]
    %v50 = vld [vmem:[#allocation2 + $0x10] sm:$0xf]
    %v51 = vld [vmem:[#allocation2 + $0x14] sm:$0xf]
    %v52 = vld [vmem:[#allocation2 + $0x18] sm:$0xf]
    %v53 = vld [vmem:[#allocation2 + $0x1c] sm:$0xf]
    %v54 = vld [vmem:[#allocation2 + $0x20] sm:$0xf]
    %v55 = vld [vmem:[#allocation2 + $0x24] sm:$0xf]
    %v56 = vld [vmem:[#allocation2 + $0x28] sm:$0xf]
    %v57 = vld [vmem:[#allocation2 + $0x2c] sm:$0xf]
    %v58 = vld [vmem:[#allocation2 + $0x30] sm:$0xf]
    %v59 = vld [vmem:[#allocation2 + $0x34] sm:$0xf]
    %v60 = vld [vmem:[#allocation2 + $0x38] sm:$0xf]
    %v61 = vld [vmem:[#allocation2 + $0x3c] sm:$0xf]
    %v62 = vld [vmem:[#allocation5] sm:$0xf]
    %v63 = vld [vmem:[#allocation5 + $0x4] sm:$0xf]
    %v64 = vld [vmem:[#allocation5 + $0x8] sm:$0xf]
    %v65 = vld [vmem:[#allocation5 + $0xc] sm:$0xf]
    %v66 = vld [vmem:[#allocation5 + $0x10] sm:$0xf]
    %v67 = vld [vmem:[#allocation5 + $0x14] sm:$0xf]
    %v68 = vld [vmem:[#allocation5 + $0x18] sm:$0xf]
    %v69 = vld [vmem:[#allocation5 + $0x1c] sm:$0xf]
    %v70 = vld [vmem:[#allocation5 + $0x20] sm:$0xf]
    %v71 = vld [vmem:[#allocation5 + $0x24] sm:$0xf]
    %v72 = vld [vmem:[#allocation5 + $0x28] sm:$0xf]
    %v73 = vld [vmem:[#allocation5 + $0x2c] sm:$0xf]
    %v74 = vld [vmem:[#allocation5 + $0x30] sm:$0xf]
    %v75 = vld [vmem:[#allocation5 + $0x34] sm:$0xf]
    %v76 = vld [vmem:[#allocation5 + $0x38] sm:$0xf]
    %v77 = vld [vmem:[#allocation5 + $0x3c] sm:$0xf]
    %v94 = vunpack.c.l.b16 %v46
    %v95 = vunpack.c.l.b16 %v47
    %v96 = vunpack.c.l.b16 %v48
    %v97 = vunpack.c.l.b16 %v49
    %v98 = vunpack.c.l.b16 %v50
    %v99 = vunpack.c.l.b16 %v51
    %v100 = vunpack.c.l.b16 %v52
    %v101 = vunpack.c.l.b16 %v53
    %v102 = vunpack.c.l.b16 %v54
    %v103 = vunpack.c.l.b16 %v55
    %v104 = vunpack.c.l.b16 %v56
    %v105 = vunpack.c.l.b16 %v57
    %v106 = vunpack.c.l.b16 %v58
    %v107 = vunpack.c.l.b16 %v59
    %v108 = vunpack.c.l.b16 %v60
    %v109 = vunpack.c.l.b16 %v61
    %v110 = vpack.c.b16 %v95, %v94
    %v111 = vpack.c.b16 %v97, %v96
    %v112 = vpack.c.b16 %v99, %v98
    %v113 = vpack.c.b16 %v101, %v100
    %v114 = vpack.c.b16 %v103, %v102
    %v115 = vpack.c.b16 %v105, %v104
    %v116 = vpack.c.b16 %v107, %v106
    %v117 = vpack.c.b16 %v109, %v108
    %v142 = vunpack.c.l.b16 %v62
    %v143 = vunpack.c.l.b16 %v63
    %v144 = vunpack.c.l.b16 %v64
    %v145 = vunpack.c.l.b16 %v65
    %v146 = vunpack.c.l.b16 %v66
    %v147 = vunpack.c.l.b16 %v67
    %v148 = vunpack.c.l.b16 %v68
    %v149 = vunpack.c.l.b16 %v69
    %v150 = vunpack.c.l.b16 %v70
    %v151 = vunpack.c.l.b16 %v71
    %v152 = vunpack.c.l.b16 %v72
    %v153 = vunpack.c.l.b16 %v73
    %v154 = vunpack.c.l.b16 %v74
    %v155 = vunpack.c.l.b16 %v75
    %v156 = vunpack.c.l.b16 %v76
    %v157 = vunpack.c.l.b16 %v77
    %v158 = vpack.c.b16 %v143, %v142
    %v159 = vpack.c.b16 %v145, %v144
    %v160 = vpack.c.b16 %v147, %v146
    %v161 = vpack.c.b16 %v149, %v148
    %v162 = vpack.c.b16 %v151, %v150
    %v163 = vpack.c.b16 %v153, %v152
    %v164 = vpack.c.b16 %v155, %v154
    %v165 = vpack.c.b16 %v157, %v156
    %174 = vmatprep.subr.bf16.mxu0 0
    %175 = vmatpush1.bf16.msra.mxu0 %v165
    %176 = vmatprep.subr.bf16.mxu0 0
    %177 = vmatpush1.bf16.msra.mxu0 %v164
    %178 = vmatprep.subr.bf16.mxu0 0
    %179 = vmatpush1.bf16.msra.mxu0 %v163
    %180 = vmatprep.subr.bf16.mxu0 0
    %181 = vmatpush1.bf16.msra.mxu0 %v162
    %182 = vmatprep.subr.bf16.mxu0 0
    %183 = vmatpush1.bf16.msra.mxu0 %v161
    %184 = vmatprep.subr.bf16.mxu0 0
    %185 = vmatpush1.bf16.msra.mxu0 %v160
    %186 = vmatprep.subr.bf16.mxu0 0
    %187 = vmatpush1.bf16.msra.mxu0 %v159
    %188 = vmatprep.subr.bf16.mxu0 0
    %189 = vmatpush1.bf16.msra.mxu0 %v158
    %190 = vmatprep.subr.bf16.mxu0 0
    %191 = vmatpush2.bf16.msra.mxu0 0
    %192 = vmatprep.subr.bf16.mxu0 0
    %193 = vmatpush2.bf16.msra.mxu0 0
    %194 = vmatprep.subr.bf16.mxu0 0
    %195 = vmatpush2.bf16.msra.mxu0 0
    %196 = vmatprep.subr.bf16.mxu0 0
    %197 = vmatpush2.bf16.msra.mxu0 0
    %198 = vmatprep.subr.bf16.mxu0 0
    %199 = vmatpush2.bf16.msra.mxu0 0
    %200 = vmatprep.subr.bf16.mxu0 0
    %201 = vmatpush2.bf16.msra.mxu0 0
    %202 = vmatprep.subr.bf16.mxu0 0
    %203 = vmatpush2.bf16.msra.mxu0 0
    %204 = vmatprep.subr.bf16.mxu0 0
    %205 = vmatpush2.bf16.msra.mxu0 0
    %206 = vmatprep.mubr.bf16.mxu0 0
    %207 = vmatmul.mubr.bf16.gmra.mxu0 %v110
    %v208 = vpop.f32.mrf.mxu0
    %v209 = vadd.f32 0.0, %v208
    %v210 = vpop.f32.mrf.mxu0
    %v211 = vpop.f32.mrf.mxu0
    %v212 = vadd.f32 0.0, %v211
    %v213 = vpop.f32.mrf.mxu0
    %214 = vmatprep.mubr.bf16.mxu0 0
    %215 = vmatmul.mubr.bf16.gmra.mxu0 %v111
    %v216 = vpop.f32.mrf.mxu0
    %v217 = vadd.f32 0.0, %v216
    %v218 = vpop.f32.mrf.mxu0
    %v219 = vpop.f32.mrf.mxu0
    %v220 = vadd.f32 0.0, %v219
    %v221 = vpop.f32.mrf.mxu0
    %222 = vmatprep.mubr.bf16.mxu0 0
    %223 = vmatmul.mubr.bf16.gmra.mxu0 %v112
    %v224 = vpop.f32.mrf.mxu0
    %v225 = vadd.f32 0.0, %v224
    %v226 = vpop.f32.mrf.mxu0
    %v227 = vpop.f32.mrf.mxu0
    %v228 = vadd.f32 0.0, %v227
    %v229 = vpop.f32.mrf.mxu0
    %230 = vmatprep.mubr.bf16.mxu0 0
    %231 = vmatmul.mubr.bf16.gmra.mxu0 %v113
    %v232 = vpop.f32.mrf.mxu0
    %v233 = vadd.f32 0.0, %v232
    %v234 = vpop.f32.mrf.mxu0
    %v235 = vpop.f32.mrf.mxu0
    %v236 = vadd.f32 0.0, %v235
    %v237 = vpop.f32.mrf.mxu0
    %238 = vmatprep.mubr.bf16.mxu0 0
    %239 = vmatmul.mubr.bf16.gmra.mxu0 %v114
    %v240 = vpop.f32.mrf.mxu0
    %v241 = vadd.f32 0.0, %v240
    %v242 = vpop.f32.mrf.mxu0
    %v243 = vpop.f32.mrf.mxu0
    %v244 = vadd.f32 0.0, %v243
    %v245 = vpop.f32.mrf.mxu0
    %246 = vmatprep.mubr.bf16.mxu0 0
    %247 = vmatmul.mubr.bf16.gmra.mxu0 %v115
    %v248 = vpop.f32.mrf.mxu0
    %v249 = vadd.f32 0.0, %v248
    %v250 = vpop.f32.mrf.mxu0
    %v251 = vpop.f32.mrf.mxu0
    %v252 = vadd.f32 0.0, %v251
    %v253 = vpop.f32.mrf.mxu0
    %254 = vmatprep.mubr.bf16.mxu0 0
    %255 = vmatmul.mubr.bf16.gmra.mxu0 %v116
    %v256 = vpop.f32.mrf.mxu0
    %v257 = vadd.f32 0.0, %v256
    %v258 = vpop.f32.mrf.mxu0
    %v259 = vpop.f32.mrf.mxu0
    %v260 = vadd.f32 0.0, %v259
    %v261 = vpop.f32.mrf.mxu0
    %262 = vmatprep.mubr.bf16.mxu0 0
    %263 = vmatmul.mubr.bf16.gmra.mxu0 %v117
    %v264 = vpop.f32.mrf.mxu0
    %v265 = vadd.f32 0.0, %v264
    %v266 = vpop.f32.mrf.mxu0
    %v267 = vpop.f32.mrf.mxu0
    %v268 = vadd.f32 0.0, %v267
    %v269 = vpop.f32.mrf.mxu0
    %270 = vdwg.mxu0
    %v271 = vld [vmem:[%s2] sm:$0x1]
    %v273 = vlaneseq
    %v274 = vshrl.u32 %v273, 7
    %v275 = vsub.s32 0, %v274
    %v276 = vrot.slane %v271, %v275
    %v278 = vmul.f32 %v209, %v276
    %v279 = vmul.f32 %v212, %v276
    %v280 = vmul.f32 %v217, %v276
    %v281 = vmul.f32 %v220, %v276
    %v282 = vmul.f32 %v225, %v276
    %v283 = vmul.f32 %v228, %v276
    %v284 = vmul.f32 %v233, %v276
    %v285 = vmul.f32 %v236, %v276
    %v286 = vmul.f32 %v241, %v276
    %v287 = vmul.f32 %v244, %v276
    %v288 = vmul.f32 %v249, %v276
    %v289 = vmul.f32 %v252, %v276
    %v290 = vmul.f32 %v257, %v276
    %v291 = vmul.f32 %v260, %v276
    %v292 = vmul.f32 %v265, %v276
    %v293 = vmul.f32 %v268, %v276
    %294 = vadd.xlane.f32.xlu0 %v278
    %v295 = vpop.xlane.xlu0 %294
    %296 = vadd.xlane.f32.xlu0 %v279
    %v297 = vpop.xlane.xlu0 %296
    %298 = vadd.xlane.f32.xlu0 %v280
    %v299 = vpop.xlane.xlu0 %298
    %300 = vadd.xlane.f32.xlu0 %v281
    %v301 = vpop.xlane.xlu0 %300
    %302 = vadd.xlane.f32.xlu0 %v282
    %v303 = vpop.xlane.xlu0 %302
    %304 = vadd.xlane.f32.xlu0 %v283
    %v305 = vpop.xlane.xlu0 %304
    %306 = vadd.xlane.f32.xlu0 %v284
    %v307 = vpop.xlane.xlu0 %306
    %308 = vadd.xlane.f32.xlu0 %v285
    %v309 = vpop.xlane.xlu0 %308
    %310 = vadd.xlane.f32.xlu0 %v286
    %v311 = vpop.xlane.xlu0 %310
    %312 = vadd.xlane.f32.xlu0 %v287
    %v313 = vpop.xlane.xlu0 %312
    %314 = vadd.xlane.f32.xlu0 %v288
    %v315 = vpop.xlane.xlu0 %314
    %316 = vadd.xlane.f32.xlu0 %v289
    %v317 = vpop.xlane.xlu0 %316
    %318 = vadd.xlane.f32.xlu0 %v290
    %v319 = vpop.xlane.xlu0 %318
    %320 = vadd.xlane.f32.xlu0 %v291
    %v321 = vpop.xlane.xlu0 %320
    %322 = vadd.xlane.f32.xlu0 %v292
    %v323 = vpop.xlane.xlu0 %322
    %324 = vadd.xlane.f32.xlu0 %v293
    %v325 = vpop.xlane.xlu0 %324
    %vm326 = vcmask 7168
    %327 = vst.msk [vmem:[%s4] sm:$0xff] %vm326, %v295
    %328 = vst.msk [vmem:[%s4 + $0x8] sm:$0xff] %vm326, %v297
    %329 = vst.msk [vmem:[%s4 + $0x10] sm:$0xff] %vm326, %v299
    %330 = vst.msk [vmem:[%s4 + $0x18] sm:$0xff] %vm326, %v301
    %331 = vst.msk [vmem:[%s4 + $0x20] sm:$0xff] %vm326, %v303
    %332 = vst.msk [vmem:[%s4 + $0x28] sm:$0xff] %vm326, %v305
    %333 = vst.msk [vmem:[%s4 + $0x30] sm:$0xff] %vm326, %v307
    %334 = vst.msk [vmem:[%s4 + $0x38] sm:$0xff] %vm326, %v309
    %335 = vst.msk [vmem:[%s4 + $0x40] sm:$0xff] %vm326, %v311
    %336 = vst.msk [vmem:[%s4 + $0x48] sm:$0xff] %vm326, %v313
    %337 = vst.msk [vmem:[%s4 + $0x50] sm:$0xff] %vm326, %v315
    %338 = vst.msk [vmem:[%s4 + $0x58] sm:$0xff] %vm326, %v317
    %339 = vst.msk [vmem:[%s4 + $0x60] sm:$0xff] %vm326, %v319
    %340 = vst.msk [vmem:[%s4 + $0x68] sm:$0xff] %vm326, %v321
    %341 = vst.msk [vmem:[%s4 + $0x70] sm:$0xff] %vm326, %v323
    %342 = vst.msk [vmem:[%s4 + $0x78] sm:$0xff] %vm326, %v325
    %v343 = vpack.c.bf16 %v212, %v209
    %v344 = vpack.c.bf16 %v220, %v217
    %v345 = vpack.c.bf16 %v228, %v225
    %v346 = vpack.c.bf16 %v236, %v233
    %v347 = vpack.c.bf16 %v244, %v241
    %v348 = vpack.c.bf16 %v252, %v249
    %v349 = vpack.c.bf16 %v260, %v257
    %v350 = vpack.c.bf16 %v268, %v265
    %v359 = vunpack.c.l.b16 %v343
    %v360 = vunpack.c.h.b16 %v343
    %v361 = vunpack.c.l.b16 %v344
    %v362 = vunpack.c.h.b16 %v344
    %v363 = vunpack.c.l.b16 %v345
    %v364 = vunpack.c.h.b16 %v345
    %v365 = vunpack.c.l.b16 %v346
    %v366 = vunpack.c.h.b16 %v346
    %v367 = vunpack.c.l.b16 %v347
    %v368 = vunpack.c.h.b16 %v347
    %v369 = vunpack.c.l.b16 %v348
    %v370 = vunpack.c.h.b16 %v348
    %v371 = vunpack.c.l.b16 %v349
    %v372 = vunpack.c.h.b16 %v349
    %v373 = vunpack.c.l.b16 %v350
    %v374 = vunpack.c.h.b16 %v350
    %v375 = vpack.c.b16 %v359, %v359
    %v376 = vpack.c.b16 %v360, %v360
    %v377 = vpack.c.b16 %v361, %v361
    %v378 = vpack.c.b16 %v362, %v362
    %v379 = vpack.c.b16 %v363, %v363
    %v380 = vpack.c.b16 %v364, %v364
    %v381 = vpack.c.b16 %v365, %v365
    %v382 = vpack.c.b16 %v366, %v366
    %v383 = vpack.c.b16 %v367, %v367
    %v384 = vpack.c.b16 %v368, %v368
    %v385 = vpack.c.b16 %v369, %v369
    %v386 = vpack.c.b16 %v370, %v370
    %v387 = vpack.c.b16 %v371, %v371
    %v388 = vpack.c.b16 %v372, %v372
    %v389 = vpack.c.b16 %v373, %v373
    %v390 = vpack.c.b16 %v374, %v374
    %407 = vst [vmem:[#allocation7] sm:$0xf] %v375
    %408 = vst [vmem:[#allocation7 + $0x4] sm:$0xf] %v376
    %409 = vst [vmem:[#allocation7 + $0x8] sm:$0xf] %v377
    %410 = vst [vmem:[#allocation7 + $0xc] sm:$0xf] %v378
    %411 = vst [vmem:[#allocation7 + $0x10] sm:$0xf] %v379
    %412 = vst [vmem:[#allocation7 + $0x14] sm:$0xf] %v380
    %413 = vst [vmem:[#allocation7 + $0x18] sm:$0xf] %v381
    %414 = vst [vmem:[#allocation7 + $0x1c] sm:$0xf] %v382
    %415 = vst [vmem:[#allocation7 + $0x20] sm:$0xf] %v383
    %416 = vst [vmem:[#allocation7 + $0x24] sm:$0xf] %v384
    %417 = vst [vmem:[#allocation7 + $0x28] sm:$0xf] %v385
    %418 = vst [vmem:[#allocation7 + $0x2c] sm:$0xf] %v386
    %419 = vst [vmem:[#allocation7 + $0x30] sm:$0xf] %v387
    %420 = vst [vmem:[#allocation7 + $0x34] sm:$0xf] %v388
    %421 = vst [vmem:[#allocation7 + $0x38] sm:$0xf] %v389
    %422 = vst [vmem:[#allocation7 + $0x3c] sm:$0xf] %v390
    // Predicated region
    $region22: #{tpu_custom_call.1} parent=1 // pred_check
      _
    $region23: #{tpu_custom_call.1} parent=1 // pred_check_branch
      %424 = sbr.rel (0) target = $region25
    $region24: #{tpu_custom_call.1} parent=1 // pred_region
      %s426 = ssub.s32 1024, 1024
      %427 = vsyncadd [#allocation4], %s426
      %s428 = sshll.u32 [#allocation7], 4
      %s429 = int_to_ptr.vmem [resolvable:$true] %s428
      %434 = dma.vmem_to_hbm [thread:$0]  %s429, 1024, %s3, [#allocation4], 64, 64, 4
    $region25: #{tpu_custom_call.1} parent=1 // pred_fallthru
      _
    // Predicated region
    $region26: #{tpu_custom_call.1} parent=1 // pred_check
      _
    $region27: #{tpu_custom_call.1} parent=1 // pred_check_branch
      %436 = sbr.rel (0) target = $region29
    $region28: #{tpu_custom_call.1} parent=1 // pred_region
      _
    $region29: #{tpu_custom_call.1} parent=1 // pred_fallthru
      _
    // Predicated region
    $region30: #{tpu_custom_call.1} parent=1 // pred_check
      _
    $region31: #{tpu_custom_call.1} parent=1 // pred_check_branch
      %438 = sbr.rel (0) target = $region33
    $region32: #{tpu_custom_call.1} parent=1 // pred_region
      %439 = dma.done [#allocation4], 1024
    $region33: #{tpu_custom_call.1} parent=1 // pred_fallthru
      _
    // Predicated region
    $region34: #{tpu_custom_call.1} parent=1 // pred_check
      _
    $region35: #{tpu_custom_call.1} parent=1 // pred_check_branch
      %441 = sbr.rel (0) target = $region37
    $region36: #{tpu_custom_call.1} parent=1 // pred_region
      _
    $region37: #{tpu_custom_call.1} parent=1 // pred_fallthru
      _
    %442 = vsyncpa [#allocation3], 1
    %443 = vsyncpa [#allocation6], 1
    %444 = vsyncpa [#allocation4], 1

</llo_original>
